<compile_context>
chip_gen: v7x
topology: tpu7x:2x2x1
jax: 0.10.0
libtpu: 0.0.40
codegen_flags: <defaults>
</compile_context>

<pallas_src>
import jax
import jax.numpy as jnp
from jax.experimental import pallas as pl
from jax.experimental.pallas import tpu as pltpu


def _mlp_kernel(x_ref, w1_ref, b1_ref, w2_ref, b2_ref, w3_ref, b3_ref, o_ref):
    # x tile: (TM, s_dim) f32 -> cast to bf16 in-kernel for the MXU.
    x = x_ref[...].astype(jnp.bfloat16)

    # layer 1: Linear(s_dim -> latent) + ReLU   (f32 accumulate, f32 elementwise)
    h1 = jnp.dot(x, w1_ref[...], preferred_element_type=jnp.float32) + b1_ref[...]
    h1 = jnp.maximum(h1, 0.0).astype(jnp.bfloat16)

    # layer 2: Linear(latent -> latent) + ReLU
    h2 = jnp.dot(h1, w2_ref[...], preferred_element_type=jnp.float32) + b2_ref[...]
    h2 = jnp.maximum(h2, 0.0).astype(jnp.bfloat16)

    # layer 3 (last_layer): Linear(latent -> c_dim), no activation
    o_ref[...] = (
        jnp.dot(h2, w3_ref[...], preferred_element_type=jnp.float32) + b3_ref[...]
    ).astype(o_ref.dtype)


def state_encoder_forward(x, params, *, block_b=2048):
    """x: [B, s_dim] float32; params: dict of weights/biases (see init_params)."""
    B, s_dim = x.shape
    latent = params["w1"].shape[1]
    c_dim = params["w3"].shape[1]

    # --- batch tile: big (default 2048 rows), multiple of 8, but capped so the
    #     grid keeps >=4 steps when B allows (v7x: both TCs get work) -----------
    quarter = pl.cdiv(pl.cdiv(B, 4), 8) * 8       # ~B/4 rounded up to mult of 8
    tm = max(8, min(int(block_b), quarter))
    b_pad = pl.cdiv(B, tm) * tm
    if b_pad != B:
        x = jnp.pad(x, ((0, b_pad - B), (0, 0)))  # only the ragged tail

    # --- bf16 matmul operands (accumulation stays f32 inside the kernel) -------
    w1 = params["w1"].astype(jnp.bfloat16)
    w2 = params["w2"].astype(jnp.bfloat16)
    w3 = params["w3"].astype(jnp.bfloat16)
    b1 = params["b1"].astype(jnp.float32)
    b2 = params["b2"].astype(jnp.float32)
    b3 = params["b3"].astype(jnp.float32)

    grid = (b_pad // tm,)

    def resident(shape):
        # weights / biases: same block every grid step -> kept resident in VMEM
        return pl.BlockSpec(shape, lambda i: (0, 0))

    flops = 2 * b_pad * (s_dim * latent + latent * latent + latent * c_dim)
    bytes_accessed = (
        b_pad * s_dim * 4                                    # x in (f32)
        + b_pad * c_dim * 4                                  # out (f32)
        + (s_dim * latent + latent * latent + latent * c_dim) * 2  # bf16 weights
        + (2 * latent + c_dim) * 4                           # f32 biases
    )
    cost = pl.CostEstimate(
        flops=flops, transcendentals=0, bytes_accessed=bytes_accessed
    )

    out = pl.pallas_call(
        _mlp_kernel,
        out_shape=jax.ShapeDtypeStruct((b_pad, c_dim), jnp.float32),
        grid=grid,
        in_specs=[
            pl.BlockSpec((tm, s_dim), lambda i: (i, 0)),  # x: tiled over batch
            resident((s_dim, latent)),                    # w1
            resident((1, latent)),                        # b1
            resident((latent, latent)),                   # w2
            resident((1, latent)),                        # b2
            resident((latent, c_dim)),                    # w3
            resident((1, c_dim)),                         # b3
        ],
        out_specs=pl.BlockSpec((tm, c_dim), lambda i: (i, 0)),
        compiler_params=pltpu.CompilerParams(
            dimension_semantics=("parallel",),            # lets v7x split batch over 2 TCs
        ),
        cost_estimate=cost,
    )(x, w1, b1, w2, b2, w3, b3)

    # strip batch padding only (output last dim is already exactly c_dim)
    return out if b_pad == B else out[:B]


def init_params(key, s_dim, latent_dim=32, c_dim=10):
    """Deterministic synthetic init mirroring the module's parameter shapes.

    PyTorch module init uses weights_init_rnd on hidden layers and
    orthogonal_(gain=0.01) + zero bias on the last layer; here we use
    deterministic random normals (hidden) and a small-gain last layer.
    """
    k1, k2, k3 = jax.random.split(key, 3)
    params = {
        # stored as [in, out] (transpose of torch's [out, in])
        "w1": jax.random.normal(k1, (s_dim, latent_dim), jnp.float32)
        * (1.0 / jnp.sqrt(s_dim)),
        "b1": jnp.zeros((1, latent_dim), jnp.float32),
        "w2": jax.random.normal(k2, (latent_dim, latent_dim), jnp.float32)
        * (1.0 / jnp.sqrt(latent_dim)),
        "b2": jnp.zeros((1, latent_dim), jnp.float32),
        # last layer: small gain (~orthogonal_(0.01)), zero bias
        "w3": jax.random.normal(k3, (latent_dim, c_dim), jnp.float32) * 0.01,
        "b3": jnp.zeros((1, c_dim), jnp.float32),
    }
    return params


def reference_forward(x, params):
    h1 = jnp.maximum(x @ params["w1"] + params["b1"], 0.0)
    h2 = jnp.maximum(h1 @ params["w2"] + params["b2"], 0.0)
    return h2 @ params["w3"] + params["b3"]


if __name__ == "__main__":
    key = jax.random.PRNGKey(0)
    k_x, k_p = jax.random.split(key)

    # Small but grid-exercising shapes: tm caps at ~B/4 -> 4 grid steps of 64 rows.
    B, S_DIM, LATENT, C_DIM = 256, 16, 32, 10
    x = jax.random.normal(k_x, (B, S_DIM), jnp.float32)
    params = init_params(k_p, S_DIM, LATENT, C_DIM)

    out = state_encoder_forward(x, params)
    out = jax.block_until_ready(out)

    ref = reference_forward(x, params)
    assert out.shape == (B, C_DIM)
    # bf16 matmul operands (f32 accumulation) -> relaxed tolerance vs f32 reference
    max_err = float(jnp.max(jnp.abs(out - ref)))
    assert jnp.allclose(out, ref, atol=1e-2, rtol=1e-2), max_err

    print("KERNEL_OK")
</pallas_src>

<mosaic_0001>
module attributes {stable_mosaic.version = 11 : i64} {
  func.func @_mlp_kernel(%arg0: i32, %arg1: memref<64x16xf32, #tpu.memory_space<vmem>>, %arg2: memref<16x32xbf16, #tpu.memory_space<vmem>>, %arg3: memref<1x32xf32, #tpu.memory_space<vmem>>, %arg4: memref<32x32xbf16, #tpu.memory_space<vmem>>, %arg5: memref<1x32xf32, #tpu.memory_space<vmem>>, %arg6: memref<32x10xbf16, #tpu.memory_space<vmem>>, %arg7: memref<1x10xf32, #tpu.memory_space<vmem>>, %arg8: memref<64x10xf32, #tpu.memory_space<vmem>>) attributes {dimension_semantics = [#tpu.dimension_semantics<parallel>], iteration_bounds = array<i64: 4>, scalar_prefetch = 0 : i64, scratch_operands = 0 : i64, tpu.core_type = #tpu.core_type<tc>, window_params = [{transform_indices = @transform_0, window_bounds = array<i64: 64, 16>}, {pipeline_mode = #tpu.pipeline_mode<synchronous>, transform_indices = @transform_1, window_bounds = array<i64: 16, 32>}, {pipeline_mode = #tpu.pipeline_mode<synchronous>, transform_indices = @transform_2, window_bounds = array<i64: 1, 32>}, {pipeline_mode = #tpu.pipeline_mode<synchronous>, transform_indices = @transform_3, window_bounds = array<i64: 32, 32>}, {pipeline_mode = #tpu.pipeline_mode<synchronous>, transform_indices = @transform_4, window_bounds = array<i64: 1, 32>}, {pipeline_mode = #tpu.pipeline_mode<synchronous>, transform_indices = @transform_5, window_bounds = array<i64: 32, 10>}, {pipeline_mode = #tpu.pipeline_mode<synchronous>, transform_indices = @transform_6, window_bounds = array<i64: 1, 10>}, {transform_indices = @transform_7, window_bounds = array<i64: 64, 10>}]} {
    %c0 = arith.constant 0 : index
    %c0_0 = arith.constant 0 : index
    %0 = vector.load %arg1[%c0, %c0_0] : memref<64x16xf32, #tpu.memory_space<vmem>>, vector<64x16xf32>
    %1 = arith.truncf %0 : vector<64x16xf32> to vector<64x16xbf16>
    %c0_1 = arith.constant 0 : index
    %c0_2 = arith.constant 0 : index
    %2 = vector.load %arg2[%c0_1, %c0_2] : memref<16x32xbf16, #tpu.memory_space<vmem>>, vector<16x32xbf16>
    %cst = arith.constant dense<0.000000e+00> : vector<64x32xf32>
    %3 = tpu.matmul %1, %2, %cst {dimension_numbers = #tpu.dot_dimension_numbers<[1], [0], [0], [1], [0, 0, 1, 1], [], []>} : vector<64x16xbf16>, vector<16x32xbf16>, vector<64x32xf32> -> vector<64x32xf32>
    %c0_3 = arith.constant 0 : index
    %c0_4 = arith.constant 0 : index
    %4 = vector.load %arg3[%c0_3, %c0_4] : memref<1x32xf32, #tpu.memory_space<vmem>>, vector<1x32xf32>
    %5 = vector.broadcast %4 : vector<1x32xf32> to vector<64x32xf32>
    %6 = arith.addf %3, %5 : vector<64x32xf32>
    %cst_5 = arith.constant 0.000000e+00 : f32
    %7 = vector.broadcast %cst_5 : f32 to vector<64x32xf32>
    %8 = arith.maximumf %6, %7 : vector<64x32xf32>
    %9 = arith.truncf %8 : vector<64x32xf32> to vector<64x32xbf16>
    %c0_6 = arith.constant 0 : index
    %c0_7 = arith.constant 0 : index
    %10 = vector.load %arg4[%c0_6, %c0_7] : memref<32x32xbf16, #tpu.memory_space<vmem>>, vector<32x32xbf16>
    %cst_8 = arith.constant dense<0.000000e+00> : vector<64x32xf32>
    %11 = tpu.matmul %9, %10, %cst_8 {dimension_numbers = #tpu.dot_dimension_numbers<[1], [0], [0], [1], [0, 0, 1, 1], [], []>} : vector<64x32xbf16>, vector<32x32xbf16>, vector<64x32xf32> -> vector<64x32xf32>
    %c0_9 = arith.constant 0 : index
    %c0_10 = arith.constant 0 : index
    %12 = vector.load %arg5[%c0_9, %c0_10] : memref<1x32xf32, #tpu.memory_space<vmem>>, vector<1x32xf32>
    %13 = vector.broadcast %12 : vector<1x32xf32> to vector<64x32xf32>
    %14 = arith.addf %11, %13 : vector<64x32xf32>
    %cst_11 = arith.constant 0.000000e+00 : f32
    %15 = vector.broadcast %cst_11 : f32 to vector<64x32xf32>
    %16 = arith.maximumf %14, %15 : vector<64x32xf32>
    %17 = arith.truncf %16 : vector<64x32xf32> to vector<64x32xbf16>
    %c0_12 = arith.constant 0 : index
    %c0_13 = arith.constant 0 : index
    %18 = vector.load %arg6[%c0_12, %c0_13] : memref<32x10xbf16, #tpu.memory_space<vmem>>, vector<32x10xbf16>
    %cst_14 = arith.constant dense<0.000000e+00> : vector<64x10xf32>
    %19 = tpu.matmul %17, %18, %cst_14 {dimension_numbers = #tpu.dot_dimension_numbers<[1], [0], [0], [1], [0, 0, 1, 1], [], []>} : vector<64x32xbf16>, vector<32x10xbf16>, vector<64x10xf32> -> vector<64x10xf32>
    %c0_15 = arith.constant 0 : index
    %c0_16 = arith.constant 0 : index
    %20 = vector.load %arg7[%c0_15, %c0_16] : memref<1x10xf32, #tpu.memory_space<vmem>>, vector<1x10xf32>
    %21 = vector.broadcast %20 : vector<1x10xf32> to vector<64x10xf32>
    %22 = arith.addf %19, %21 : vector<64x10xf32>
    %c0_17 = arith.constant 0 : index
    %c0_18 = arith.constant 0 : index
    %23 = vector.load %arg8[%c0_17, %c0_18] : memref<64x10xf32, #tpu.memory_space<vmem>>, vector<64x10xf32>
    tpu.vector_store %arg8[%c0_17, %c0_18], %22 {strides = array<i32>} : memref<64x10xf32, #tpu.memory_space<vmem>>, vector<64x10xf32>,
    return
  }
  func.func @transform_0(%arg0: i32) -> (i32, i32) {
    %c0_i32 = arith.constant 0 : i32
    %c0_i32_0 = arith.constant 0 : i32
    return %arg0, %c0_i32 : i32, i32
  }
  func.func @transform_1(%arg0: i32) -> (i32, i32) {
    %c0_i32 = arith.constant 0 : i32
    %c0_i32_0 = arith.constant 0 : i32
    %c0_i32_1 = arith.constant 0 : i32
    return %c0_i32, %c0_i32_0 : i32, i32
  }
  func.func @transform_2(%arg0: i32) -> (i32, i32) {
    %c0_i32 = arith.constant 0 : i32
    %c0_i32_0 = arith.constant 0 : i32
    %c0_i32_1 = arith.constant 0 : i32
    return %c0_i32, %c0_i32_0 : i32, i32
  }
  func.func @transform_3(%arg0: i32) -> (i32, i32) {
    %c0_i32 = arith.constant 0 : i32
    %c0_i32_0 = arith.constant 0 : i32
    %c0_i32_1 = arith.constant 0 : i32
    return %c0_i32, %c0_i32_0 : i32, i32
  }
  func.func @transform_4(%arg0: i32) -> (i32, i32) {
    %c0_i32 = arith.constant 0 : i32
    %c0_i32_0 = arith.constant 0 : i32
    %c0_i32_1 = arith.constant 0 : i32
    return %c0_i32, %c0_i32_0 : i32, i32
  }
  func.func @transform_5(%arg0: i32) -> (i32, i32) {
    %c0_i32 = arith.constant 0 : i32
    %c0_i32_0 = arith.constant 0 : i32
    %c0_i32_1 = arith.constant 0 : i32
    return %c0_i32, %c0_i32_0 : i32, i32
  }
  func.func @transform_6(%arg0: i32) -> (i32, i32) {
    %c0_i32 = arith.constant 0 : i32
    %c0_i32_0 = arith.constant 0 : i32
    %c0_i32_1 = arith.constant 0 : i32
    return %c0_i32, %c0_i32_0 : i32, i32
  }
  func.func @transform_7(%arg0: i32) -> (i32, i32) {
    %c0_i32 = arith.constant 0 : i32
    %c0_i32_0 = arith.constant 0 : i32
    return %arg0, %c0_i32 : i32, i32
  }
}

</mosaic_0001>

<llo_original>
// kernel: tpu_custom_call.1
$region0: #{tpu_custom_call.1}
  #allocation0 [shape = 'u32[]', space=smem, size = 0x4, offset = 0x4, fixed_abs, tag = 'smem constant byte address 0x4 - core index']
  #allocation1 [shape = 'u32[144,128]{1,0:T(1,128)}', space=vmem, size = 0x12000, scoped, tag = 'internal scratch']
  %s0 = inlined_call_operand.vmem [shape: f32[256,16], index: 0, kind: input, shape index: {}]
  %s1 = inlined_call_operand.vmem [shape: bf16[16,32], index: 1, kind: input, shape index: {}]
  %s2 = inlined_call_operand.vmem [shape: f32[1,32], index: 2, kind: input, shape index: {}]
  %s3 = inlined_call_operand.vmem [shape: bf16[32,32], index: 3, kind: input, shape index: {}]
  %s4 = inlined_call_operand.vmem [shape: f32[1,32], index: 4, kind: input, shape index: {}]
  %s5 = inlined_call_operand.vmem [shape: bf16[32,10], index: 5, kind: input, shape index: {}]
  %s6 = inlined_call_operand.vmem [shape: f32[1,10], index: 6, kind: input, shape index: {}]
  %s7 = inlined_call_operand.vmem [shape: f32[256,10], index: 7, kind: output, shape index: {}]
  %s8 = sld [smem:[#allocation0]]
  $region61: #{tpu_custom_call.1} parent=0
    _
  %s10 = ssub.s32 1, %s8
  %s11 = scalar_select 0, %s10, %s8
  loop: start=0, step=1, limit=6
  $region2: #{tpu_custom_call.1} parent=0 // loop_pre_header
    _
  $region3: #{tpu_custom_call.1} parent=0 // loop_header
    %s13 = sphi 0, %s17
    %p14 = scmp.ge.s32.totalorder %s13, 6
    %s23 = sphi 0, %s25
    %s26 = sphi 0, %s23
    %s27 = sphi 0, %s26
    %s43 = sphi 0, %s27
    %s47 = sphi 0, %s47
    %s49 = sphi 0, %s47
    %s50 = sphi 0, %s49
    %s64 = sphi 0, %s50
    %s68 = sphi 0, %s68
    %s70 = sphi 0, %s68
    %s71 = sphi 0, %s70
    %s85 = sphi 0, %s71
    %s89 = sphi 0, %s89
    %s91 = sphi 0, %s89
    %s92 = sphi 0, %s91
    %s106 = sphi 0, %s92
    %s110 = sphi 0, %s110
    %s112 = sphi 0, %s110
    %s113 = sphi 0, %s112
    %s127 = sphi 0, %s113
    %s131 = sphi 0, %s131
    %s133 = sphi 0, %s131
    %s134 = sphi 0, %s133
    %s148 = sphi 0, %s134
    %s152 = sphi 0, %s152
    %s154 = sphi 0, %s152
    %s155 = sphi 0, %s154
    %s169 = sphi 0, %s155
    %s175 = sphi 0, %s177
    %s178 = sphi 0, %s175
    %s179 = sphi 0, %s178
    %s195 = sphi 0, %s179
  $region4: #{tpu_custom_call.1} parent=0 // loop_header_branch
    %16 = sbr.rel (%p14) target = $region8
  $region5: #{tpu_custom_call.1} parent=0 // loop_body
    %s18 = ssub.s32 %s13, 1
    %s19 = ssub.s32 %s13, 2
    %s20 = sadd.s32 %s13, 1
    %s21 = ssub.s32 %s13, %s20
    %p22 = scmp.eq.s32.totalorder %s21, 0
    %s24 = sadd.s32 %s23, 1
    %s25 = scalar_select %p22, %s23, %s24
    %p28 = pneg %p22
    %p29 = scmp.eq.s32.totalorder %s13, 3
    %p30 = por %p28, %p29
    %p31 = scmp.ne.s32.totalorder %s23, %s26
    %p32 = scmp.eq.s32.totalorder %s13, 0
    %p33 = por %p31, %p32
    %p34 = scmp.ne.s32.totalorder %s23, %s26
    %p35 = scmp.eq.s32.totalorder %s18, 3
    %p36 = por %p34, %p35
    %p37 = scmp.ne.s32.totalorder %s26, %s27
    %p38 = scmp.eq.s32.totalorder %s18, 0
    %p39 = por %p37, %p38
    %p40 = scmp.ne.s32.totalorder %s26, %s27
    %p41 = scmp.eq.s32.totalorder %s19, 3
    %p42 = por %p40, %p41
    %p44 = scmp.ne.s32.totalorder %s27, %s43
    %p45 = scmp.eq.s32.totalorder %s19, 0
    %p46 = por %p44, %p45
    %s48 = sadd.s32 %s47, 1
    %p51 = scmp.eq.s32.totalorder %s13, 3
    %p52 = scmp.ne.s32.totalorder %s47, %s49
    %p53 = scmp.eq.s32.totalorder %s13, 0
    %p54 = por %p52, %p53
    %p55 = scmp.ne.s32.totalorder %s47, %s49
    %p56 = scmp.eq.s32.totalorder %s18, 3
    %p57 = por %p55, %p56
    %p58 = scmp.ne.s32.totalorder %s49, %s50
    %p59 = scmp.eq.s32.totalorder %s18, 0
    %p60 = por %p58, %p59
    %p61 = scmp.ne.s32.totalorder %s49, %s50
    %p62 = scmp.eq.s32.totalorder %s19, 3
    %p63 = por %p61, %p62
    %p65 = scmp.ne.s32.totalorder %s50, %s64
    %p66 = scmp.eq.s32.totalorder %s19, 0
    %p67 = por %p65, %p66
    %s69 = sadd.s32 %s68, 1
    %p72 = scmp.eq.s32.totalorder %s13, 3
    %p73 = scmp.ne.s32.totalorder %s68, %s70
    %p74 = scmp.eq.s32.totalorder %s13, 0
    %p75 = por %p73, %p74
    %p76 = scmp.ne.s32.totalorder %s68, %s70
    %p77 = scmp.eq.s32.totalorder %s18, 3
    %p78 = por %p76, %p77
    %p79 = scmp.ne.s32.totalorder %s70, %s71
    %p80 = scmp.eq.s32.totalorder %s18, 0
    %p81 = por %p79, %p80
    %p82 = scmp.ne.s32.totalorder %s70, %s71
    %p83 = scmp.eq.s32.totalorder %s19, 3
    %p84 = por %p82, %p83
    %p86 = scmp.ne.s32.totalorder %s71, %s85
    %p87 = scmp.eq.s32.totalorder %s19, 0
    %p88 = por %p86, %p87
    %s90 = sadd.s32 %s89, 1
    %p93 = scmp.eq.s32.totalorder %s13, 3
    %p94 = scmp.ne.s32.totalorder %s89, %s91
    %p95 = scmp.eq.s32.totalorder %s13, 0
    %p96 = por %p94, %p95
    %p97 = scmp.ne.s32.totalorder %s89, %s91
    %p98 = scmp.eq.s32.totalorder %s18, 3
    %p99 = por %p97, %p98
    %p100 = scmp.ne.s32.totalorder %s91, %s92
    %p101 = scmp.eq.s32.totalorder %s18, 0
    %p102 = por %p100, %p101
    %p103 = scmp.ne.s32.totalorder %s91, %s92
    %p104 = scmp.eq.s32.totalorder %s19, 3
    %p105 = por %p103, %p104
    %p107 = scmp.ne.s32.totalorder %s92, %s106
    %p108 = scmp.eq.s32.totalorder %s19, 0
    %p109 = por %p107, %p108
    %s111 = sadd.s32 %s110, 1
    %p114 = scmp.eq.s32.totalorder %s13, 3
    %p115 = scmp.ne.s32.totalorder %s110, %s112
    %p116 = scmp.eq.s32.totalorder %s13, 0
    %p117 = por %p115, %p116
    %p118 = scmp.ne.s32.totalorder %s110, %s112
    %p119 = scmp.eq.s32.totalorder %s18, 3
    %p120 = por %p118, %p119
    %p121 = scmp.ne.s32.totalorder %s112, %s113
    %p122 = scmp.eq.s32.totalorder %s18, 0
    %p123 = por %p121, %p122
    %p124 = scmp.ne.s32.totalorder %s112, %s113
    %p125 = scmp.eq.s32.totalorder %s19, 3
    %p126 = por %p124, %p125
    %p128 = scmp.ne.s32.totalorder %s113, %s127
    %p129 = scmp.eq.s32.totalorder %s19, 0
    %p130 = por %p128, %p129
    %s132 = sadd.s32 %s131, 1
    %p135 = scmp.eq.s32.totalorder %s13, 3
    %p136 = scmp.ne.s32.totalorder %s131, %s133
    %p137 = scmp.eq.s32.totalorder %s13, 0
    %p138 = por %p136, %p137
    %p139 = scmp.ne.s32.totalorder %s131, %s133
    %p140 = scmp.eq.s32.totalorder %s18, 3
    %p141 = por %p139, %p140
    %p142 = scmp.ne.s32.totalorder %s133, %s134
    %p143 = scmp.eq.s32.totalorder %s18, 0
    %p144 = por %p142, %p143
    %p145 = scmp.ne.s32.totalorder %s133, %s134
    %p146 = scmp.eq.s32.totalorder %s19, 3
    %p147 = por %p145, %p146
    %p149 = scmp.ne.s32.totalorder %s134, %s148
    %p150 = scmp.eq.s32.totalorder %s19, 0
    %p151 = por %p149, %p150
    %s153 = sadd.s32 %s152, 1
    %p156 = scmp.eq.s32.totalorder %s13, 3
    %p157 = scmp.ne.s32.totalorder %s152, %s154
    %p158 = scmp.eq.s32.totalorder %s13, 0
    %p159 = por %p157, %p158
    %p160 = scmp.ne.s32.totalorder %s152, %s154
    %p161 = scmp.eq.s32.totalorder %s18, 3
    %p162 = por %p160, %p161
    %p163 = scmp.ne.s32.totalorder %s154, %s155
    %p164 = scmp.eq.s32.totalorder %s18, 0
    %p165 = por %p163, %p164
    %p166 = scmp.ne.s32.totalorder %s154, %s155
    %p167 = scmp.eq.s32.totalorder %s19, 3
    %p168 = por %p166, %p167
    %p170 = scmp.ne.s32.totalorder %s155, %s169
    %p171 = scmp.eq.s32.totalorder %s19, 0
    %p172 = por %p170, %p171
    %s173 = ssub.s32 %s13, %s20
    %p174 = scmp.eq.s32.totalorder %s173, 0
    %s176 = sadd.s32 %s175, 1
    %s177 = scalar_select %p174, %s175, %s176
    %p180 = pneg %p174
    %p181 = scmp.eq.s32.totalorder %s13, 3
    %p182 = por %p180, %p181
    %p183 = scmp.ne.s32.totalorder %s175, %s178
    %p184 = scmp.eq.s32.totalorder %s13, 0
    %p185 = por %p183, %p184
    %p186 = scmp.ne.s32.totalorder %s175, %s178
    %p187 = scmp.eq.s32.totalorder %s18, 3
    %p188 = por %p186, %p187
    %p189 = scmp.ne.s32.totalorder %s178, %s179
    %p190 = scmp.eq.s32.totalorder %s18, 0
    %p191 = por %p189, %p190
    %p192 = scmp.ne.s32.totalorder %s178, %s179
    %p193 = scmp.eq.s32.totalorder %s19, 3
    %p194 = por %p192, %p193
    %p196 = scmp.ne.s32.totalorder %s179, %s195
    %p197 = scmp.eq.s32.totalorder %s19, 0
    %p198 = por %p196, %p197
    %p199 = scmp.le.s32.totalorder 1, %s13
    %p200 = scmp.lt.s32.totalorder %s13, 5
    %p201 = pnand %p199, %p200
    %p202 = pneg %p201
    // Predicated region
    $region9: #{tpu_custom_call.1} parent=5 // pred_check
      _
    $region10: #{tpu_custom_call.1} parent=5 // pred_check_branch
      %204 = sbr.rel (%p201) target = $region12
    $region11: #{tpu_custom_call.1} parent=5 // pred_region
      %s205 = ssub.s32 %s13, 1
      // Predicated region
      $region13: #{tpu_custom_call.1} parent=11 // pred_check
        %p206 = pneg %p60
      $region14: #{tpu_custom_call.1} parent=11 // pred_check_branch
        %208 = sbr.rel (%p206) target = $region16
      $region15: #{tpu_custom_call.1} parent=11 // pred_region
        _
      $region16: #{tpu_custom_call.1} parent=11 // pred_fallthru
        _
      // Predicated region
      $region17: #{tpu_custom_call.1} parent=11 // pred_check
        %p209 = pneg %p81
      $region18: #{tpu_custom_call.1} parent=11 // pred_check_branch
        %211 = sbr.rel (%p209) target = $region20
      $region19: #{tpu_custom_call.1} parent=11 // pred_region
        _
      $region20: #{tpu_custom_call.1} parent=11 // pred_fallthru
        _
      // Predicated region
      $region21: #{tpu_custom_call.1} parent=11 // pred_check
        %p212 = pneg %p102
      $region22: #{tpu_custom_call.1} parent=11 // pred_check_branch
        %214 = sbr.rel (%p212) target = $region24
      $region23: #{tpu_custom_call.1} parent=11 // pred_region
        _
      $region24: #{tpu_custom_call.1} parent=11 // pred_fallthru
        _
      // Predicated region
      $region25: #{tpu_custom_call.1} parent=11 // pred_check
        %p215 = pneg %p123
      $region26: #{tpu_custom_call.1} parent=11 // pred_check_branch
        %217 = sbr.rel (%p215) target = $region28
      $region27: #{tpu_custom_call.1} parent=11 // pred_region
        _
      $region28: #{tpu_custom_call.1} parent=11 // pred_fallthru
        _
      // Predicated region
      $region29: #{tpu_custom_call.1} parent=11 // pred_check
        %p218 = pneg %p144
      $region30: #{tpu_custom_call.1} parent=11 // pred_check_branch
        %220 = sbr.rel (%p218) target = $region32
      $region31: #{tpu_custom_call.1} parent=11 // pred_region
        _
      $region32: #{tpu_custom_call.1} parent=11 // pred_fallthru
        _
      // Predicated region
      $region33: #{tpu_custom_call.1} parent=11 // pred_check
        %p221 = pneg %p165
      $region34: #{tpu_custom_call.1} parent=11 // pred_check_branch
        %223 = sbr.rel (%p221) target = $region36
      $region35: #{tpu_custom_call.1} parent=11 // pred_region
        _
      $region36: #{tpu_custom_call.1} parent=11 // pred_fallthru
        _
    $region12: #{tpu_custom_call.1} parent=5 // pred_fallthru
      _
    %p224 = scmp.lt.s32.totalorder %s13, 4
    // Predicated region
    $region37: #{tpu_custom_call.1} parent=5 // pred_check
      %p225 = pneg %p224
    $region38: #{tpu_custom_call.1} parent=5 // pred_check_branch
      %227 = sbr.rel (%p225) target = $region40
    $region39: #{tpu_custom_call.1} parent=5 // pred_region
      // Predicated region
      $region41: #{tpu_custom_call.1} parent=39 // pred_check
        %p228 = pneg %p33
      $region42: #{tpu_custom_call.1} parent=39 // pred_check_branch
        %230 = sbr.rel (%p228) target = $region44
      $region43: #{tpu_custom_call.1} parent=39 // pred_region
        %s231 = smul.u32 8, %s13
        %p232 = scmp.lt.s32.totalorder %s231, 31
        %s233 = scalar_select %p232, %s231, 31
        %s234 = smul.addr %s233, 8
        %s235 = scalar_lea.vmem %s0, %s234
        %s236 = smul.u32 8, %s13
      $region44: #{tpu_custom_call.1} parent=39 // pred_fallthru
        _
    $region40: #{tpu_custom_call.1} parent=5 // pred_fallthru
      _
    %p237 = scmp.le.s32.totalorder 1, %s13
    %p238 = scmp.lt.s32.totalorder %s13, 5
    %p239 = pnand %p237, %p238
    %p240 = pneg %p239
    // Predicated region
    $region45: #{tpu_custom_call.1} parent=5 // pred_check
      _
    $region46: #{tpu_custom_call.1} parent=5 // pred_check_branch
      %242 = sbr.rel (%p239) target = $region48
    $region47: #{tpu_custom_call.1} parent=5 // pred_region
      %s243 = ssub.s32 %s13, 1
      %s244 = smul.u32 8, %s18
      %p245 = scmp.lt.s32.totalorder %s244, 31
      %s246 = scalar_select %p245, %s244, 31
      %s247 = smul.addr %s246, 8
      %s248 = scalar_lea.vmem %s0, %s247
      %p249 = pneg %p39
      %p250 = pneg %p36
      %p251 = pneg %p60
      %p252 = pneg %p57
      %p253 = pneg %p81
      %p254 = pneg %p78
      %p255 = pneg %p102
      %p256 = pneg %p99
      %p257 = pneg %p123
      %p258 = pneg %p120
      %p259 = pneg %p144
      %p260 = pneg %p141
      %p261 = pneg %p165
      %p262 = pneg %p162
      %p263 = pneg %p191
      %p264 = pneg %p188
      %s265 = smul.u32 8, %s18
      %p266 = scmp.lt.s32.totalorder %s265, 31
      %s267 = scalar_select %p266, %s265, 31
      %s268 = smul.addr %s267, 8
      %s269 = scalar_lea.vmem %s7, %s268
      %s270 = smul.u32 8, %s18
      %p271 = scmp.lt.s32.totalorder %s270, 31
      %s272 = scalar_select %p271, %s270, 31
      %s273 = smul.addr %s272, 8
      %s274 = scalar_lea.vmem %s0, %s273
      %s275 = smul.u32 8, %s18
      %s276 = smul.u32 8, %s18
      %p277 = scmp.lt.s32.totalorder %s276, 31
      %s278 = scalar_select %p277, %s276, 31
      %s279 = smul.addr %s278, 8
      %s280 = scalar_lea.vmem %s7, %s279
      %s281 = smul.u32 8, %s18
      %v283 = vld [vmem:[%s274] sm:$0xff]
      %v284 = vld [vmem:[%s274 + $0x8] sm:$0xff]
      %v285 = vld [vmem:[%s274 + $0x10] sm:$0xff]
      %v286 = vld [vmem:[%s274 + $0x18] sm:$0xff]
      %v287 = vld [vmem:[%s274 + $0x20] sm:$0xff]
      %v288 = vld [vmem:[%s274 + $0x28] sm:$0xff]
      %v289 = vld [vmem:[%s274 + $0x30] sm:$0xff]
      %v290 = vld [vmem:[%s274 + $0x38] sm:$0xff]
      %v291 = vpack.c.bf16 %v284, %v283
      %v292 = vpack.c.bf16 %v286, %v285
      %v293 = vpack.c.bf16 %v288, %v287
      %v294 = vpack.c.bf16 %v290, %v289
      %v295 = vld [vmem:[%s1] sm:$0xf]
      %v296 = vld [vmem:[%s1 + $0x4] sm:$0xf]
      %v297 = vld [vmem:[%s2] sm:$0x1]
      %v299 = vlaneseq
      %v300 = vshrl.u32 %v299, 7
      %v301 = vsub.s32 0, %v300
      %v302 = vrot.slane %v297, %v301
      %v306 = vunpack.c.l.b16 %v295
      %v307 = vunpack.c.l.b16 %v296
      %v308 = vpack.c.b16 %v307, %v306
      %vm310 = vcmask 130048
      %v312 = vsel %vm310, %v291, 0
      %v315 = vsel %vm310, %v292, 0
      %v318 = vsel %vm310, %v293, 0
      %v321 = vsel %vm310, %v294, 0
      %323 = vmatprep.subr.bf16.mxu0 0
      %324 = vmatpush1.bf16.msra.mxu0 %v308
      %325 = vmatprep.subr.bf16.mxu0 0
      %326 = vmatpush1.bf16.msra.mxu0 0
      %327 = vmatprep.subr.bf16.mxu0 0
      %328 = vmatpush1.bf16.msra.mxu0 0
      %329 = vmatprep.subr.bf16.mxu0 0
      %330 = vmatpush1.bf16.msra.mxu0 0
      %331 = vmatprep.subr.bf16.mxu0 0
      %332 = vmatpush1.bf16.msra.mxu0 0
      %333 = vmatprep.subr.bf16.mxu0 0
      %334 = vmatpush1.bf16.msra.mxu0 0
      %335 = vmatprep.subr.bf16.mxu0 0
      %336 = vmatpush1.bf16.msra.mxu0 0
      %337 = vmatprep.subr.bf16.mxu0 0
      %338 = vmatpush1.bf16.msra.mxu0 0
      %339 = vmatprep.subr.bf16.mxu0 0
      %340 = vmatpush1.bf16.msra.mxu0 0
      %341 = vmatprep.subr.bf16.mxu0 0
      %342 = vmatpush1.bf16.msra.mxu0 0
      %343 = vmatprep.subr.bf16.mxu0 0
      %344 = vmatpush1.bf16.msra.mxu0 0
      %345 = vmatprep.subr.bf16.mxu0 0
      %346 = vmatpush1.bf16.msra.mxu0 0
      %347 = vmatprep.subr.bf16.mxu0 0
      %348 = vmatpush1.bf16.msra.mxu0 0
      %349 = vmatprep.subr.bf16.mxu0 0
      %350 = vmatpush1.bf16.msra.mxu0 0
      %351 = vmatprep.subr.bf16.mxu0 0
      %352 = vmatpush1.bf16.msra.mxu0 0
      %353 = vmatprep.subr.bf16.mxu0 0
      %354 = vmatpush1.bf16.msra.mxu0 0
      %355 = vmatprep.mubr.bf16.mxu0 0
      %356 = vmatmul.mubr.bf16.gmra.mrb[0].mxu0 %v312
      %v357 = vpop.f32.mrb[0].mxu0
      %v358 = vadd.f32 %v302, %v357
      %v359 = vpop.f32.mrb[0].mxu0
      %v360 = vpop.f32.mrb[0].mxu0
      %v361 = vadd.f32 %v302, %v360
      %v362 = vpop.f32.mrb[0].mxu0
      %363 = vmatprep.mubr.bf16.mxu0 0
      %364 = vmatmul.mubr.bf16.gmra.mrb[0].mxu0 %v315
      %v365 = vpop.f32.mrb[0].mxu0
      %v366 = vadd.f32 %v302, %v365
      %v367 = vpop.f32.mrb[0].mxu0
      %v368 = vpop.f32.mrb[0].mxu0
      %v369 = vadd.f32 %v302, %v368
      %v370 = vpop.f32.mrb[0].mxu0
      %371 = vmatprep.mubr.bf16.mxu0 0
      %372 = vmatmul.mubr.bf16.gmra.mrb[0].mxu0 %v318
      %v373 = vpop.f32.mrb[0].mxu0
      %v374 = vadd.f32 %v302, %v373
      %v375 = vpop.f32.mrb[0].mxu0
      %v376 = vpop.f32.mrb[0].mxu0
      %v377 = vadd.f32 %v302, %v376
      %v378 = vpop.f32.mrb[0].mxu0
      %379 = vmatprep.mubr.bf16.mxu0 0
      %380 = vmatmul.mubr.bf16.gmra.mrb[0].mxu0 %v321
      %v381 = vpop.f32.mrb[0].mxu0
      %v382 = vadd.f32 %v302, %v381
      %v383 = vpop.f32.mrb[0].mxu0
      %v384 = vpop.f32.mrb[0].mxu0
      %v385 = vadd.f32 %v302, %v384
      %v386 = vpop.f32.mrb[0].mxu0
      %387 = vdwg.mxu0
      %v388 = vmax.f32 %v358, 0.0
      %v389 = vmax.f32 %v361, 0.0
      %v390 = vmax.f32 %v366, 0.0
      %v391 = vmax.f32 %v369, 0.0
      %v392 = vmax.f32 %v374, 0.0
      %v393 = vmax.f32 %v377, 0.0
      %v394 = vmax.f32 %v382, 0.0
      %v395 = vmax.f32 %v385, 0.0
      %v396 = vpack.c.bf16 %v389, %v388
      %v397 = vpack.c.bf16 %v391, %v390
      %v398 = vpack.c.bf16 %v393, %v392
      %v399 = vpack.c.bf16 %v395, %v394
      %v400 = vld [vmem:[%s3] sm:$0xf]
      %v401 = vld [vmem:[%s3 + $0x4] sm:$0xf]
      %v402 = vld [vmem:[%s3 + $0x8] sm:$0xf]
      %v403 = vld [vmem:[%s3 + $0xc] sm:$0xf]
      %v404 = vld [vmem:[%s4] sm:$0x1]
      %v406 = vlaneseq
      %v407 = vshrl.u32 %v406, 7
      %v408 = vsub.s32 0, %v407
      %v409 = vrot.slane %v404, %v408
      %v415 = vunpack.c.l.b16 %v400
      %v416 = vunpack.c.l.b16 %v401
      %v417 = vunpack.c.l.b16 %v402
      %v418 = vunpack.c.l.b16 %v403
      %v419 = vpack.c.b16 %v416, %v415
      %v420 = vpack.c.b16 %v418, %v417
      %vm423 = vcmask 261120
      %v425 = vsel %vm423, %v396, 0
      %v428 = vsel %vm423, %v397, 0
      %v431 = vsel %vm423, %v398, 0
      %v434 = vsel %vm423, %v399, 0
      %436 = vmatprep.subr.bf16.mxu0 0
      %437 = vmatpush1.bf16.msra.mxu0 %v419
      %438 = vmatprep.subr.bf16.mxu0 0
      %439 = vmatpush1.bf16.msra.mxu0 %v420
      %440 = vmatprep.subr.bf16.mxu0 0
      %441 = vmatpush1.bf16.msra.mxu0 0
      %442 = vmatprep.subr.bf16.mxu0 0
      %443 = vmatpush1.bf16.msra.mxu0 0
      %444 = vmatprep.subr.bf16.mxu0 0
      %445 = vmatpush1.bf16.msra.mxu0 0
      %446 = vmatprep.subr.bf16.mxu0 0
      %447 = vmatpush1.bf16.msra.mxu0 0
      %448 = vmatprep.subr.bf16.mxu0 0
      %449 = vmatpush1.bf16.msra.mxu0 0
      %450 = vmatprep.subr.bf16.mxu0 0
      %451 = vmatpush1.bf16.msra.mxu0 0
      %452 = vmatprep.subr.bf16.mxu0 0
      %453 = vmatpush1.bf16.msra.mxu0 0
      %454 = vmatprep.subr.bf16.mxu0 0
      %455 = vmatpush1.bf16.msra.mxu0 0
      %456 = vmatprep.subr.bf16.mxu0 0
      %457 = vmatpush1.bf16.msra.mxu0 0
      %458 = vmatprep.subr.bf16.mxu0 0
      %459 = vmatpush1.bf16.msra.mxu0 0
      %460 = vmatprep.subr.bf16.mxu0 0
      %461 = vmatpush1.bf16.msra.mxu0 0
      %462 = vmatprep.subr.bf16.mxu0 0
      %463 = vmatpush1.bf16.msra.mxu0 0
      %464 = vmatprep.subr.bf16.mxu0 0
      %465 = vmatpush1.bf16.msra.mxu0 0
      %466 = vmatprep.subr.bf16.mxu0 0
      %467 = vmatpush1.bf16.msra.mxu0 0
      %468 = vmatprep.mubr.bf16.mxu0 0
      %469 = vmatmul.mubr.bf16.gmra.mrb[0].mxu0 %v425
      %v470 = vpop.f32.mrb[0].mxu0
      %v471 = vadd.f32 %v409, %v470
      %v472 = vpop.f32.mrb[0].mxu0
      %v473 = vpop.f32.mrb[0].mxu0
      %v474 = vadd.f32 %v409, %v473
      %v475 = vpop.f32.mrb[0].mxu0
      %476 = vmatprep.mubr.bf16.mxu0 0
      %477 = vmatmul.mubr.bf16.gmra.mrb[0].mxu0 %v428
      %v478 = vpop.f32.mrb[0].mxu0
      %v479 = vadd.f32 %v409, %v478
      %v480 = vpop.f32.mrb[0].mxu0
      %v481 = vpop.f32.mrb[0].mxu0
      %v482 = vadd.f32 %v409, %v481
      %v483 = vpop.f32.mrb[0].mxu0
      %484 = vmatprep.mubr.bf16.mxu0 0
      %485 = vmatmul.mubr.bf16.gmra.mrb[0].mxu0 %v431
      %v486 = vpop.f32.mrb[0].mxu0
      %v487 = vadd.f32 %v409, %v486
      %v488 = vpop.f32.mrb[0].mxu0
      %v489 = vpop.f32.mrb[0].mxu0
      %v490 = vadd.f32 %v409, %v489
      %v491 = vpop.f32.mrb[0].mxu0
      %492 = vmatprep.mubr.bf16.mxu0 0
      %493 = vmatmul.mubr.bf16.gmra.mrb[0].mxu0 %v434
      %v494 = vpop.f32.mrb[0].mxu0
      %v495 = vadd.f32 %v409, %v494
      %v496 = vpop.f32.mrb[0].mxu0
      %v497 = vpop.f32.mrb[0].mxu0
      %v498 = vadd.f32 %v409, %v497
      %v499 = vpop.f32.mrb[0].mxu0
      %500 = vdwg.mxu0
      %v501 = vmax.f32 %v471, 0.0
      %v502 = vmax.f32 %v474, 0.0
      %v503 = vmax.f32 %v479, 0.0
      %v504 = vmax.f32 %v482, 0.0
      %v505 = vmax.f32 %v487, 0.0
      %v506 = vmax.f32 %v490, 0.0
      %v507 = vmax.f32 %v495, 0.0
      %v508 = vmax.f32 %v498, 0.0
      %v509 = vpack.c.bf16 %v502, %v501
      %v510 = vpack.c.bf16 %v504, %v503
      %v511 = vpack.c.bf16 %v506, %v505
      %v512 = vpack.c.bf16 %v508, %v507
      %v513 = vld [vmem:[%s5] sm:$0xf]
      %v514 = vld [vmem:[%s5 + $0x4] sm:$0xf]
      %v515 = vld [vmem:[%s5 + $0x8] sm:$0xf]
      %v516 = vld [vmem:[%s5 + $0xc] sm:$0xf]
      %v517 = vld [vmem:[%s6] sm:$0x1]
      %v519 = vlaneseq
      %v520 = vshrl.u32 %v519, 7
      %v521 = vsub.s32 0, %v520
      %v522 = vrot.slane %v517, %v521
      %v528 = vunpack.c.l.b16 %v513
      %v529 = vunpack.c.l.b16 %v514
      %v530 = vunpack.c.l.b16 %v515
      %v531 = vunpack.c.l.b16 %v516
      %v532 = vpack.c.b16 %v529, %v528
      %v533 = vpack.c.b16 %v531, %v530
      %v537 = vsel %vm423, %v509, 0
      %v540 = vsel %vm423, %v510, 0
      %v543 = vsel %vm423, %v511, 0
      %v546 = vsel %vm423, %v512, 0
      %548 = vmatprep.subr.bf16.mxu0 0
      %549 = vmatpush1.bf16.msra.mxu0 %v532
      %550 = vmatprep.subr.bf16.mxu0 0
      %551 = vmatpush1.bf16.msra.mxu0 %v533
      %552 = vmatprep.subr.bf16.mxu0 0
      %553 = vmatpush1.bf16.msra.mxu0 0
      %554 = vmatprep.subr.bf16.mxu0 0
      %555 = vmatpush1.bf16.msra.mxu0 0
      %556 = vmatprep.subr.bf16.mxu0 0
      %557 = vmatpush1.bf16.msra.mxu0 0
      %558 = vmatprep.subr.bf16.mxu0 0
      %559 = vmatpush1.bf16.msra.mxu0 0
      %560 = vmatprep.subr.bf16.mxu0 0
      %561 = vmatpush1.bf16.msra.mxu0 0
      %562 = vmatprep.subr.bf16.mxu0 0
      %563 = vmatpush1.bf16.msra.mxu0 0
      %564 = vmatprep.subr.bf16.mxu0 0
      %565 = vmatpush1.bf16.msra.mxu0 0
      %566 = vmatprep.subr.bf16.mxu0 0
      %567 = vmatpush1.bf16.msra.mxu0 0
      %568 = vmatprep.subr.bf16.mxu0 0
      %569 = vmatpush1.bf16.msra.mxu0 0
      %570 = vmatprep.subr.bf16.mxu0 0
      %571 = vmatpush1.bf16.msra.mxu0 0
      %572 = vmatprep.subr.bf16.mxu0 0
      %573 = vmatpush1.bf16.msra.mxu0 0
      %574 = vmatprep.subr.bf16.mxu0 0
      %575 = vmatpush1.bf16.msra.mxu0 0
      %576 = vmatprep.subr.bf16.mxu0 0
      %577 = vmatpush1.bf16.msra.mxu0 0
      %578 = vmatprep.subr.bf16.mxu0 0
      %579 = vmatpush1.bf16.msra.mxu0 0
      %580 = vmatprep.mubr.bf16.mxu0 0
      %581 = vmatmul.mubr.bf16.gmra.mrb[0].mxu0 %v537
      %v582 = vpop.f32.mrb[0].mxu0
      %v583 = vadd.f32 %v522, %v582
      %v584 = vpop.f32.mrb[0].mxu0
      %v585 = vpop.f32.mrb[0].mxu0
      %v586 = vadd.f32 %v522, %v585
      %v587 = vpop.f32.mrb[0].mxu0
      %588 = vmatprep.mubr.bf16.mxu0 0
      %589 = vmatmul.mubr.bf16.gmra.mrb[0].mxu0 %v540
      %v590 = vpop.f32.mrb[0].mxu0
      %v591 = vadd.f32 %v522, %v590
      %v592 = vpop.f32.mrb[0].mxu0
      %v593 = vpop.f32.mrb[0].mxu0
      %v594 = vadd.f32 %v522, %v593
      %v595 = vpop.f32.mrb[0].mxu0
      %596 = vmatprep.mubr.bf16.mxu0 0
      %597 = vmatmul.mubr.bf16.gmra.mrb[0].mxu0 %v543
      %v598 = vpop.f32.mrb[0].mxu0
      %v599 = vadd.f32 %v522, %v598
      %v600 = vpop.f32.mrb[0].mxu0
      %v601 = vpop.f32.mrb[0].mxu0
      %v602 = vadd.f32 %v522, %v601
      %v603 = vpop.f32.mrb[0].mxu0
      %604 = vmatprep.mubr.bf16.mxu0 0
      %605 = vmatmul.mubr.bf16.gmra.mrb[0].mxu0 %v546
      %v606 = vpop.f32.mrb[0].mxu0
      %v607 = vadd.f32 %v522, %v606
      %v608 = vpop.f32.mrb[0].mxu0
      %v609 = vpop.f32.mrb[0].mxu0
      %v610 = vadd.f32 %v522, %v609
      %v611 = vpop.f32.mrb[0].mxu0
      %612 = vdwg.mxu0
      %vm613 = vcmask 80896
      %614 = vst.msk [vmem:[%s280] sm:$0xff] %vm613, %v583
      %615 = vst.msk [vmem:[%s280 + $0x8] sm:$0xff] %vm613, %v586
      %616 = vst.msk [vmem:[%s280 + $0x10] sm:$0xff] %vm613, %v591
      %617 = vst.msk [vmem:[%s280 + $0x18] sm:$0xff] %vm613, %v594
      %618 = vst.msk [vmem:[%s280 + $0x20] sm:$0xff] %vm613, %v599
      %619 = vst.msk [vmem:[%s280 + $0x28] sm:$0xff] %vm613, %v602
      %620 = vst.msk [vmem:[%s280 + $0x30] sm:$0xff] %vm613, %v607
      %621 = vst.msk [vmem:[%s280 + $0x38] sm:$0xff] %vm613, %v610
      %s622 = smul.u32 8, %s18
      %p623 = scmp.lt.s32.totalorder %s622, 31
      %s624 = scalar_select %p623, %s622, 31
      %s625 = smul.addr %s624, 8
      %s626 = scalar_lea.vmem %s7, %s625
      // Predicated region
      $region49: #{tpu_custom_call.1} parent=47 // pred_check
        %p627 = pneg %p188
      $region50: #{tpu_custom_call.1} parent=47 // pred_check_branch
        %629 = sbr.rel (%p627) target = $region52
      $region51: #{tpu_custom_call.1} parent=47 // pred_region
        %s630 = smul.u32 8, %s18
      $region52: #{tpu_custom_call.1} parent=47 // pred_fallthru
        _
    $region48: #{tpu_custom_call.1} parent=5 // pred_fallthru
      _
    %p631 = scmp.le.s32.totalorder 2, %s13
    // Predicated region
    $region53: #{tpu_custom_call.1} parent=5 // pred_check
      %p632 = pneg %p631
    $region54: #{tpu_custom_call.1} parent=5 // pred_check_branch
      %634 = sbr.rel (%p632) target = $region56
    $region55: #{tpu_custom_call.1} parent=5 // pred_region
      %s635 = ssub.s32 %s13, 2
      // Predicated region
      $region57: #{tpu_custom_call.1} parent=55 // pred_check
        %p636 = pneg %p194
      $region58: #{tpu_custom_call.1} parent=55 // pred_check_branch
        %638 = sbr.rel (%p636) target = $region60
      $region59: #{tpu_custom_call.1} parent=55 // pred_region
        %s639 = smul.u32 8, %s19
        %p640 = scmp.lt.s32.totalorder %s639, 31
        %s641 = scalar_select %p640, %s639, 31
        %s642 = smul.addr %s641, 8
        %s643 = scalar_lea.vmem %s7, %s642
      $region60: #{tpu_custom_call.1} parent=55 // pred_fallthru
        _
    $region56: #{tpu_custom_call.1} parent=5 // pred_fallthru
      _
  $region6: #{tpu_custom_call.1} parent=0 // loop_footer
    %s17 = sadd.s32 1, %s13
  $region7: #{tpu_custom_call.1} parent=0 // loop_footer_branch
    %12 = sbr.rel target = $region3
  $region8: #{tpu_custom_call.1} parent=0 // loop_exit
    _

</llo_original>
